<compile_context>
chip_gen: v5e
topology: v5e:2x2
jax: 0.10.0
libtpu: 0.0.40
codegen_flags: <defaults>
</compile_context>

<pallas_src>
import math

import numpy as np
import jax
import jax.numpy as jnp
from jax.experimental import pallas as pl
from jax.experimental.pallas import tpu as pltpu


def _cdiv(a: int, b: int) -> int:
    return -(-a // b)


def _make_kernel(rows, classes_per_step, per_class, feat_num, feat_size,
                 steps_per_group):
    """All closure constants are Python ints (nothing traced is captured)."""

    def kernel(f1_ref, f2_ref, out_ref):
        g = pl.program_id(0)
        s = pl.program_id(1)

        @pl.when(s == 0)
        def _init():
            out_ref[...] = jnp.zeros_like(out_ref)

        # Logical class-block index.  The last group's trailing steps may
        # overrun past the last real block; their rows are fully masked below.
        step = g * steps_per_group + s

        f1 = f1_ref[...].astype(jnp.float32)
        f2 = f2_ref[...].astype(jnp.float32)
        diff = f1 - f2                                          # (rows, D)

        # Zero rows outside the real feature matrix (partial last block and
        # clamped duplicate blocks).  Since feat_num == label_num * per_class,
        # this also zeroes every row of any class index >= label_num, so no
        # separate class mask is needed.  jnp.where is a select, so padded
        # garbage (possibly NaN/Inf) never propagates.
        row_in_blk = jax.lax.broadcasted_iota(jnp.int32, (rows, 1), 0)
        valid = (step * rows + row_in_blk) < feat_num
        diff = jnp.where(valid, diff, 0.0)

        # Segmented (per-class) sum of diffs via a 0/1 selection matmul on the
        # MXU: sel[c, r] = 1 iff row r of this block belongs to its class c.
        # This avoids any (L, P, D) reshape / sublane relayout.
        r_ids = jax.lax.broadcasted_iota(jnp.int32, (classes_per_step, rows), 1)
        c_ids = jax.lax.broadcasted_iota(jnp.int32, (classes_per_step, rows), 0)
        lower = c_ids * per_class
        sel = jnp.logical_and(r_ids >= lower,
                              r_ids < lower + per_class).astype(jnp.float32)
        seg = jnp.dot(sel, diff, preferred_element_type=jnp.float32)  # (C, D)

        # Lane-dense per-group partial sums of squared per-class diff sums.
        partial = jnp.sum(seg * seg, axis=0)                    # (D,)
        out_ref[...] += partial.reshape(1, 1, feat_size)

    return kernel


def hetro_center_loss(feat1, feat2, label1, label2, margin=0.01,
                      dist_type="l2", classes_per_step=None,
                      target_block_bytes=2 << 20):
    """Pallas implementation of HetroCenterLoss.forward (dist_type='l2').

    Args:
      feat1, feat2: (feat_num, feat_size) float arrays (f32 or bf16).
      label1, label2: (feat_num,) integer labels.  Like the PyTorch
        view()-based forward, samples are assumed to be grouped into
        contiguous, equal-size blocks per class; only label1's unique count
        is used.
    Returns:
      scalar float32 loss.
    """
    del margin, label2  # unused by the reference forward
    if dist_type != "l2":
        # TODO(synk): 'l1' and 'cos' dist types of the original module are not
        # implemented; only the default 'l2' (MSELoss(sum)/feat_size) is.
        raise NotImplementedError("Only dist_type='l2' is implemented.")

    feat_num, feat_size = feat1.shape
    # len(label1.unique()) is data-dependent -> resolved on host (eager), just
    # like the PyTorch module does at call time (forces a device->host sync).
    label_num = int(np.unique(np.asarray(label1)).size)
    assert feat_num % label_num == 0, "feat_num must be divisible by label_num"
    per_class = feat_num // label_num

    itemsize = jnp.dtype(feat1.dtype).itemsize
    sublane = max(8, 32 // itemsize)  # 8 (f32) / 16 (bf16) / 32 (int8)

    # ---- choose classes per grid step (block sizing, ~2 MiB per input) -----
    if classes_per_step is None:
        classes_per_step = max(
            1, int(target_block_bytes) // (per_class * feat_size * itemsize))
    classes_per_step = max(1, min(int(classes_per_step), label_num))
    if classes_per_step >= label_num:
        classes_per_step = label_num
        rows = feat_num                       # full-dim block: always legal
    else:
        # Round up so the row-block is a multiple of the sublane tile.
        m = sublane // math.gcd(per_class, sublane)
        classes_per_step = _cdiv(classes_per_step, m) * m
        if classes_per_step >= label_num:
            classes_per_step = label_num
            rows = feat_num
        else:
            rows = classes_per_step * per_class

    num_row_blocks = _cdiv(label_num, classes_per_step)
    # Leading "parallel" axis: lets v7x split the reduction over its 2 TCs;
    # on v5e/v6e (1 TC) it is just a 2-long outer loop.
    groups = 2 if num_row_blocks >= 2 else 1
    steps_per_group = _cdiv(num_row_blocks, groups)
    last_block = num_row_blocks - 1

    def in_index(g, s):
        # Clamp so dead trailing steps re-read the last real block (their
        # contribution is zeroed in-kernel by the row mask).
        return (jnp.minimum(g * steps_per_group + s, last_block), 0)

    block_bytes = rows * feat_size * itemsize
    vmem_limit = int(min(max(6 * block_bytes + (2 << 20), 16 << 20), 64 << 20))

    kernel = _make_kernel(rows, classes_per_step, per_class, feat_num,
                          feat_size, steps_per_group)

    partials = pl.pallas_call(
        kernel,
        out_shape=jax.ShapeDtypeStruct((groups, 1, feat_size), jnp.float32),
        grid_spec=pltpu.PrefetchScalarGridSpec(
            num_scalar_prefetch=0,
            grid=(groups, steps_per_group),
            in_specs=[
                pl.BlockSpec((rows, feat_size), in_index),
                pl.BlockSpec((rows, feat_size), in_index),
            ],
            out_specs=pl.BlockSpec((1, 1, feat_size), lambda g, s: (g, 0, 0)),
        ),
        compiler_params=pltpu.CompilerParams(
            dimension_semantics=("parallel", "arbitrary"),
            vmem_limit_bytes=vmem_limit,
        ),
        cost_estimate=pl.CostEstimate(
            flops=4 * feat_num * feat_size,
            transcendentals=0,
            bytes_accessed=2 * feat_num * feat_size * itemsize
            + groups * feat_size * 4,
        ),
    )(feat1, feat2)

    # MSELoss(reduction='sum')(center1, center2) / feat_size, with the
    # per-class mean (1/per_class) folded into a single final scale.
    scale = 1.0 / (float(per_class) * float(per_class) * float(feat_size))
    return jnp.sum(partials) * scale


def _reference(feat1, feat2, label_num):
    """Pure-JAX replica of the PyTorch forward (dist_type='l2')."""
    feat_size = feat1.shape[1]
    c1 = jnp.mean(feat1.reshape(label_num, -1, feat_size).astype(jnp.float32), axis=1)
    c2 = jnp.mean(feat2.reshape(label_num, -1, feat_size).astype(jnp.float32), axis=1)
    return jnp.sum((c1 - c2) ** 2) / feat_size


if __name__ == "__main__":
    label_num, per_class, feat_size = 5, 4, 128
    feat_num = label_num * per_class

    key = jax.random.PRNGKey(0)
    k1, k2 = jax.random.split(key)
    feat1 = jax.random.normal(k1, (feat_num, feat_size), dtype=jnp.float32)
    feat2 = jax.random.normal(k2, (feat_num, feat_size), dtype=jnp.float32)
    label1 = jnp.repeat(jnp.arange(label_num, dtype=jnp.int32), per_class)
    label2 = jnp.repeat(jnp.arange(label_num, dtype=jnp.int32), per_class)

    ref = _reference(feat1, feat2, label_num)

    # Auto block sizing (one block covers all classes at this small size).
    loss_a = jax.block_until_ready(hetro_center_loss(feat1, feat2, label1, label2))
    # Forced multi-step path: exercises the (groups, steps) grid, the
    # two-group split, the partial last block and the masked duplicate step.
    loss_b = jax.block_until_ready(
        hetro_center_loss(feat1, feat2, label1, label2, classes_per_step=2))

    assert jnp.allclose(loss_a, ref, rtol=1e-5, atol=1e-6), (float(loss_a), float(ref))
    assert jnp.allclose(loss_b, ref, rtol=1e-5, atol=1e-6), (float(loss_b), float(ref))

    print("KERNEL_OK")
</pallas_src>

<mosaic_0001>
module attributes {stable_mosaic.version = 11 : i64} {
  func.func @kernel(%arg0: i32, %arg1: i32, %arg2: memref<20x128xf32, #tpu.memory_space<vmem>>, %arg3: memref<20x128xf32, #tpu.memory_space<vmem>>, %arg4: memref<1x1x128xf32, #tpu.memory_space<vmem>>) attributes {dimension_semantics = [#tpu.dimension_semantics<parallel>, #tpu.dimension_semantics<arbitrary>], iteration_bounds = array<i64: 1, 1>, scalar_prefetch = 0 : i64, scratch_operands = 0 : i64, tpu.core_type = #tpu.core_type<tc>, window_params = [{transform_indices = @transform_0, window_bounds = array<i64: 20, 128>}, {transform_indices = @transform_1, window_bounds = array<i64: 20, 128>}, {transform_indices = @transform_2, window_bounds = array<i64: 1, 1, 128>}]} {
    %c0_i32 = arith.constant 0 : i32
    %0 = arith.cmpi eq, %arg1, %c0_i32 : i32
    %1 = arith.extui %0 : i1 to i32
    %c0_i32_0 = arith.constant 0 : i32
    %2 = arith.cmpi ne, %1, %c0_i32_0 : i32
    scf.if %2 {
      %cst_14 = arith.constant 0.000000e+00 : f32
      %36 = vector.broadcast %cst_14 : f32 to vector<1x1x128xf32>
      %c0_15 = arith.constant 0 : index
      %c0_16 = arith.constant 0 : index
      %c0_17 = arith.constant 0 : index
      %37 = vector.load %arg4[%c0_15, %c0_16, %c0_17] : memref<1x1x128xf32, #tpu.memory_space<vmem>>, vector<1x1x128xf32>
      tpu.vector_store %arg4[%c0_15, %c0_16, %c0_17], %36 {strides = array<i32>} : memref<1x1x128xf32, #tpu.memory_space<vmem>>, vector<1x1x128xf32>,
    } else {
    }
    %c1_i32 = arith.constant 1 : i32
    %3 = arith.muli %arg0, %c1_i32 : i32
    %4 = arith.addi %3, %arg1 : i32
    %c0 = arith.constant 0 : index
    %c0_1 = arith.constant 0 : index
    %5 = vector.load %arg2[%c0, %c0_1] : memref<20x128xf32, #tpu.memory_space<vmem>>, vector<20x128xf32>
    %c0_2 = arith.constant 0 : index
    %c0_3 = arith.constant 0 : index
    %6 = vector.load %arg3[%c0_2, %c0_3] : memref<20x128xf32, #tpu.memory_space<vmem>>, vector<20x128xf32>
    %7 = arith.subf %5, %6 : vector<20x128xf32>
    %8 = tpu.iota {dimensions = array<i32: 0>} : vector<20x1xi32>
    %c20_i32 = arith.constant 20 : i32
    %9 = arith.muli %4, %c20_i32 : i32
    %10 = vector.broadcast %9 : i32 to vector<20x1xi32>
    %11 = arith.addi %10, %8 : vector<20x1xi32>
    %c20_i32_4 = arith.constant 20 : i32
    %12 = vector.broadcast %c20_i32_4 : i32 to vector<20x1xi32>
    %13 = arith.cmpi slt, %11, %12 : vector<20x1xi32>
    %cst = arith.constant 0.000000e+00 : f32
    %14 = vector.shape_cast %13 : vector<20x1xi1> to vector<20x1xi1>
    %15 = vector.broadcast %14 : vector<20x1xi1> to vector<20x128xi1>
    %16 = vector.broadcast %cst : f32 to vector<20x128xf32>
    %17 = arith.select %15, %7, %16 : vector<20x128xi1>, vector<20x128xf32>
    %18 = tpu.iota {dimensions = array<i32: 1>} : vector<5x20xi32>
    %19 = tpu.iota {dimensions = array<i32: 0>} : vector<5x20xi32>
    %c4_i32 = arith.constant 4 : i32
    %20 = vector.broadcast %c4_i32 : i32 to vector<5x20xi32>
    %21 = arith.muli %19, %20 : vector<5x20xi32>
    %22 = arith.cmpi sge, %18, %21 : vector<5x20xi32>
    %c4_i32_5 = arith.constant 4 : i32
    %23 = vector.broadcast %c4_i32_5 : i32 to vector<5x20xi32>
    %24 = arith.addi %21, %23 : vector<5x20xi32>
    %25 = arith.cmpi slt, %18, %24 : vector<5x20xi32>
    %26 = arith.andi %22, %25 : vector<5x20xi1>
    %27 = arith.extui %26 : vector<5x20xi1> to vector<5x20xi32>
    %28 = arith.sitofp %27 : vector<5x20xi32> to vector<5x20xf32>
    %cst_6 = arith.constant dense<0.000000e+00> : vector<5x128xf32>
    %29 = tpu.matmul %28, %17, %cst_6 {dimension_numbers = #tpu.dot_dimension_numbers<[1], [0], [0], [1], [0, 0, 1, 1], [], []>} : vector<5x20xf32>, vector<20x128xf32>, vector<5x128xf32> -> vector<5x128xf32>
    %30 = arith.mulf %29, %29 : vector<5x128xf32>
    %cst_7 = arith.constant dense<0.000000e+00> : vector<128xf32>
    %31 = vector.multi_reduction <add>, %30, %cst_7 [0] : vector<5x128xf32> to vector<128xf32>
    %c0_8 = arith.constant 0 : index
    %c0_9 = arith.constant 0 : index
    %c0_10 = arith.constant 0 : index
    %32 = vector.load %arg4[%c0_8, %c0_9, %c0_10] : memref<1x1x128xf32, #tpu.memory_space<vmem>>, vector<1x1x128xf32>
    %33 = vector.shape_cast %31 : vector<128xf32> to vector<1x1x128xf32>
    %34 = arith.addf %32, %33 : vector<1x1x128xf32>
    %c0_11 = arith.constant 0 : index
    %c0_12 = arith.constant 0 : index
    %c0_13 = arith.constant 0 : index
    %35 = vector.load %arg4[%c0_11, %c0_12, %c0_13] : memref<1x1x128xf32, #tpu.memory_space<vmem>>, vector<1x1x128xf32>
    tpu.vector_store %arg4[%c0_11, %c0_12, %c0_13], %34 {strides = array<i32>} : memref<1x1x128xf32, #tpu.memory_space<vmem>>, vector<1x1x128xf32>,
    return
  }
  func.func @transform_0(%arg0: i32, %arg1: i32) -> (i32, i32) {
    %c1_i32 = arith.constant 1 : i32
    %0 = arith.muli %arg0, %c1_i32 : i32
    %1 = arith.addi %0, %arg1 : i32
    %c0_i32 = arith.constant 0 : i32
    %2 = arith.minsi %1, %c0_i32 : i32
    %c0_i32_0 = arith.constant 0 : i32
    %c0_i32_1 = arith.constant 0 : i32
    return %2, %c0_i32_0 : i32, i32
  }
  func.func @transform_1(%arg0: i32, %arg1: i32) -> (i32, i32) {
    %c1_i32 = arith.constant 1 : i32
    %0 = arith.muli %arg0, %c1_i32 : i32
    %1 = arith.addi %0, %arg1 : i32
    %c0_i32 = arith.constant 0 : i32
    %2 = arith.minsi %1, %c0_i32 : i32
    %c0_i32_0 = arith.constant 0 : i32
    %c0_i32_1 = arith.constant 0 : i32
    return %2, %c0_i32_0 : i32, i32
  }
  func.func @transform_2(%arg0: i32, %arg1: i32) -> (i32, i32, i32) {
    %c0_i32 = arith.constant 0 : i32
    %c0_i32_0 = arith.constant 0 : i32
    %c0_i32_1 = arith.constant 0 : i32
    return %arg0, %c0_i32, %c0_i32_0 : i32, i32, i32
  }
}

</mosaic_0001>

<llo_original>
// kernel: tpu_custom_call.1
$region0: #{tpu_custom_call.1}
  #allocation0 [shape = 'u32[]', space=smem, size = 0x4, offset = 0x4, fixed_abs, tag = 'smem constant byte address 0x4 - core index']
  #allocation1 [shape = 'u32[72,128]{1,0:T(1,128)}', space=vmem, size = 0x9000, scoped, tag = 'internal scratch']
  %s0 = inlined_call_operand.hbm [shape: f32[20,128], index: 0, kind: input, shape index: {}]
  %s1 = inlined_call_operand.hbm [shape: f32[20,128], index: 1, kind: input, shape index: {}]
  %s2 = inlined_call_operand.hbm [shape: f32[1,1,128], index: 2, kind: output, shape index: {}]
  %s3 = sld [smem:[#allocation0]]
  $region30: #{tpu_custom_call.1} parent=0
    _
  %s5 = ssub.s32 1, %s3
  %s6 = scalar_select 0, %s5, %s3
  $region1: #{tpu_custom_call.1} parent=0
    #allocation2 [shape = 'u8[12288]{0}', space=vmem, size = 0x3000, scoped, tag = 'input window, operand 0, single buffered']
    #allocation3 [shape = 's32[1]{0}', space=sflag, size = 0x4, scoped, tag = 'scoped memory for tpu_custom_call.1']
    #allocation4 [shape = 's32[1]{0}', space=sflag, size = 0x4, scoped, tag = 'scoped memory for tpu_custom_call.1']
    #allocation5 [shape = 'u8[12288]{0}', space=vmem, size = 0x3000, scoped, tag = 'input window, operand 1, single buffered']
    #allocation6 [shape = 's32[1]{0}', space=sflag, size = 0x4, scoped, tag = 'scoped memory for tpu_custom_call.1']
    #allocation7 [shape = 'u8[512]{0}', space=vmem, size = 0x400, scoped, tag = 'output window, operand 0, single buffered']
    %7 = vsyncpa [#allocation3], 0
    %8 = vsyncpa [#allocation6], 0
    %9 = vsyncpa [#allocation4], 0
    // Predicated region
    $region2: #{tpu_custom_call.1} parent=1 // pred_check
      _
    $region3: #{tpu_custom_call.1} parent=1 // pred_check_branch
      %11 = sbr.rel (0) target = $region5
    $region4: #{tpu_custom_call.1} parent=1 // pred_region
      %s12 = sadd.s32 0, 0
      %p13 = scmp.lt.s32.totalorder %s12, 0
      %s14 = scalar_select %p13, %s12, 0
      %s15 = smul.u32 3, %s14
      %17 = vsyncadd [#allocation3], 0
      %s18 = smul.addr %s15, 8
      %s19 = scalar_lea.hbm %s0, %s18
      %s20 = sshll.u32 %s19, 4
      %s21 = int_to_ptr.hbm [resolvable:$true] %s20
      %s22 = sshll.u32 [#allocation2], 4
      %s23 = int_to_ptr.vmem [resolvable:$true] %s22
      %28 = dma.hbm_to_vmem [thread:$0]  %s21, 384, %s23, [#allocation3], 128, 128, 8
    $region5: #{tpu_custom_call.1} parent=1 // pred_fallthru
      _
    // Predicated region
    $region6: #{tpu_custom_call.1} parent=1 // pred_check
      _
    $region7: #{tpu_custom_call.1} parent=1 // pred_check_branch
      %30 = sbr.rel (0) target = $region9
    $region8: #{tpu_custom_call.1} parent=1 // pred_region
      %s31 = sadd.s32 0, 0
      %p32 = scmp.lt.s32.totalorder %s31, 0
      %s33 = scalar_select %p32, %s31, 0
      %s34 = smul.u32 3, %s33
      %36 = vsyncadd [#allocation6], 0
      %s37 = smul.addr %s34, 8
      %s38 = scalar_lea.hbm %s1, %s37
      %s39 = sshll.u32 %s38, 4
      %s40 = int_to_ptr.hbm [resolvable:$true] %s39
      %s41 = sshll.u32 [#allocation5], 4
      %s42 = int_to_ptr.vmem [resolvable:$true] %s41
      %47 = dma.hbm_to_vmem [thread:$0]  %s40, 384, %s42, [#allocation6], 128, 128, 8
    $region9: #{tpu_custom_call.1} parent=1 // pred_fallthru
      _
    // Predicated region
    $region10: #{tpu_custom_call.1} parent=1 // pred_check
      _
    $region11: #{tpu_custom_call.1} parent=1 // pred_check_branch
      %49 = sbr.rel (0) target = $region13
    $region12: #{tpu_custom_call.1} parent=1 // pred_region
      %51 = dma.done [#allocation3], 384
    $region13: #{tpu_custom_call.1} parent=1 // pred_fallthru
      _
    // Predicated region
    $region14: #{tpu_custom_call.1} parent=1 // pred_check
      _
    $region15: #{tpu_custom_call.1} parent=1 // pred_check_branch
      %53 = sbr.rel (0) target = $region17
    $region16: #{tpu_custom_call.1} parent=1 // pred_region
      %55 = dma.done [#allocation6], 384
    $region17: #{tpu_custom_call.1} parent=1 // pred_fallthru
      _
    %s56 = sadd.s32 0, 0
    %p57 = scmp.lt.s32.totalorder %s56, 0
    %s58 = scalar_select %p57, %s56, 0
    %s59 = smul.u32 3, %s58
    %s60 = sadd.s32 0, 0
    %p61 = scmp.lt.s32.totalorder %s60, 0
    %s62 = scalar_select %p61, %s60, 0
    %s63 = smul.u32 3, %s62
    %p64 = scmp.eq.s32.totalorder 0, 0
    // Predicated region
    $region18: #{tpu_custom_call.1} parent=1 // pred_check
      %p65 = pneg %p64
    $region19: #{tpu_custom_call.1} parent=1 // pred_check_branch
      %67 = sbr.rel (%p65) target = $region21
    $region20: #{tpu_custom_call.1} parent=1 // pred_region
      %68 = vst [vmem:[#allocation7] sm:$0x1] 0.0
    $region21: #{tpu_custom_call.1} parent=1 // pred_fallthru
      _
    %s69 = sadd.s32 0, 0
    %v70 = vld [vmem:[#allocation2] sm:$0xff]
    %v71 = vld [vmem:[#allocation2 + $0x8] sm:$0xff]
    %v72 = vld [vmem:[#allocation2 + $0x10] sm:$0xf]
    %v73 = vld [vmem:[#allocation5] sm:$0xff]
    %v74 = vld [vmem:[#allocation5 + $0x8] sm:$0xff]
    %v75 = vld [vmem:[#allocation5 + $0x10] sm:$0xf]
    %v76 = vsub.f32 %v70, %v73
    %v77 = vsub.f32 %v71, %v74
    %v78 = vsub.f32 %v72, %v75
    %v79 = vlaneseq
    %v80 = vshrl.u32 %v79, 7
    %v81 = vadd.s32 %v80, 8
    %v82 = vadd.s32 %v80, 16
    %s83 = smul.u32 %s69, 20
    %v84 = vstv %s83
    %v85 = vadd.s32 %v84, %v80
    %v86 = vadd.s32 %v84, %v81
    %v87 = vadd.s32 %v84, %v82
    %vm88 = vcmp.lt.s32.totalorder %v85, 20
    %vm89 = vcmp.lt.s32.totalorder %v86, 20
    %vm90 = vcmp.lt.s32.totalorder %v87, 20
    %v91 = vsel %vm88, 1, 0
    %v92 = vsel %vm89, 1, 0
    %v93 = vsel %vm90, 1, 0
    %vm94 = vcmp.eq.s32.totalorder %v91, 1
    %vm95 = vcmp.eq.s32.totalorder %v92, 1
    %vm96 = vcmp.eq.s32.totalorder %v93, 1
    %v97 = vsel %vm94, %v76, 0.0
    %v98 = vsel %vm95, %v77, 0.0
    %v99 = vsel %vm96, %v78, 0.0
    %v100 = vlaneseq
    %v101 = vand.u32 %v100, 127
    %v102 = vmul.u32 %v80, 4
    %vm103 = vcmp.ge.s32.totalorder %v101, %v102
    %v104 = vadd.s32 %v102, 4
    %vm105 = vcmp.lt.s32.totalorder %v101, %v104
    %vm106 = vmand %vm103, %vm105
    %v107 = vsel %vm106, 1, 0
    %v108 = vcvt.s32.f32 %v107
    %vm109 = vcmask 162816
    %v111 = vsel %vm109, %v108, 0
    %vm113 = vcmask 1043456
    %v115 = vsel %vm113, %v99, 0
    %117 = vmatpush.msra.mxu0 0.0
    %118 = vmatpush.msra.mxu0 0.0
    %119 = vmatpush.msra.mxu0 0.0
    %120 = vmatpush.msra.mxu0 0.0
    %121 = vmatpush.msra.mxu0 0.0
    %122 = vmatpush.msra.mxu0 0.0
    %123 = vmatpush.msra.mxu0 0.0
    %124 = vmatpush.msra.mxu0 0.0
    %125 = vmatpush.msra.mxu0 0.0
    %126 = vmatpush.msra.mxu0 0.0
    %127 = vmatpush.msra.mxu0 0.0
    %128 = vmatpush.msra.mxu0 0.0
    %129 = vmatpush.msra.mxu0 0.0
    %130 = vmatpush.msra.mxu0 %v115
    %131 = vmatpush.msra.mxu0 %v98
    %132 = vmatpush.msra.mxu0 %v97
    %133 = vmatmul.f32.gmra.mxu0 %v111
    %v134 = vpop.f32.mrf.mxu0
    %v135 = vadd.f32 0.0, %v134
    %136 = vdwg.mxu0
    %v137 = vmul.f32 %v135, %v135
    %vm138 = vcmask 1044480
    %v139 = vsel %vm138, %v137, 0.0
    %v140 = vrot.slane %v139, 4
    %v141 = vadd.f32 %v139, %v140
    %v142 = vrot.slane %v141, 2
    %v143 = vadd.f32 %v141, %v142
    %v144 = vrot.slane %v143, 1
    %v145 = vadd.f32 %v143, %v144
    %v146 = vld [vmem:[#allocation7] sm:$0x1]
    %v147 = vadd.f32 %v146, %v145
    %148 = vst [vmem:[#allocation7] sm:$0x1] %v147
    // Predicated region
    $region22: #{tpu_custom_call.1} parent=1 // pred_check
      _
    $region23: #{tpu_custom_call.1} parent=1 // pred_check_branch
      %150 = sbr.rel (0) target = $region25
    $region24: #{tpu_custom_call.1} parent=1 // pred_region
      %152 = vsyncadd [#allocation4], 0
      %s154 = sshll.u32 [#allocation7], 4
      %s155 = int_to_ptr.vmem [resolvable:$true] %s154
      %s156 = sshll.u32 %s2, 4
      %s157 = int_to_ptr.hbm [resolvable:$true] %s156
      %159 = dma.vmem_to_hbm [thread:$0]  %s155, 16, %s157, [#allocation4]
    $region25: #{tpu_custom_call.1} parent=1 // pred_fallthru
      _
    // Predicated region
    $region26: #{tpu_custom_call.1} parent=1 // pred_check
      _
    $region27: #{tpu_custom_call.1} parent=1 // pred_check_branch
      %161 = sbr.rel (0) target = $region29
    $region28: #{tpu_custom_call.1} parent=1 // pred_region
      %163 = dma.done [#allocation4], 16
    $region29: #{tpu_custom_call.1} parent=1 // pred_fallthru
      _
    %164 = vsyncpa [#allocation3], 1
    %165 = vsyncpa [#allocation6], 1
    %166 = vsyncpa [#allocation4], 1

</llo_original>
